<compile_context>
chip_gen: v6e
topology: v6e:2x2x1
jax: 0.10.0
libtpu: 0.0.40
codegen_flags: <defaults>
</compile_context>

<pallas_src>
import jax
import jax.numpy as jnp
from jax import lax
from jax.experimental import pallas as pl
from jax.experimental.pallas import tpu as pltpu


def _round_up(n, m):
    return ((n + m - 1) // m) * m


def critic_kernel(xa_ref, wp_ref, b1_ref,
                  w2x_ref, b2_ref,
                  w3_ref, b3_ref,
                  w4_ref, b4_ref,
                  w5t_ref, b5_ref,
                  out_ref):
    f32 = jnp.float32
    cdt = wp_ref.dtype            # MXU operand dtype (bf16 or f32)
    d1 = b1_ref.shape[-1]

    xa = xa_ref[...]              # (tile, D0 + DA), already in compute dtype

    # Fused layer 1 + actions@W2a via block-diagonal packed weight.
    t = jnp.dot(xa, wp_ref[...], preferred_element_type=f32)    # (tile, D1+D2)
    h1 = jnp.maximum(t[:, :d1] + b1_ref[...], 0.0)               # relu(x@W1+b1)
    a2 = t[:, d1:]                                               # actions @ W2a

    # layer 2: relu(h1@W2x + a@W2a + b2) == relu(concat([h1, a]) @ W2 + b2)
    h2 = jnp.maximum(
        jnp.dot(h1.astype(cdt), w2x_ref[...], preferred_element_type=f32)
        + a2 + b2_ref[...], 0.0)

    # layers 3 / 4
    h3 = jnp.maximum(
        jnp.dot(h2.astype(cdt), w3_ref[...], preferred_element_type=f32)
        + b3_ref[...], 0.0)
    h4 = jnp.maximum(
        jnp.dot(h3.astype(cdt), w4_ref[...], preferred_element_type=f32)
        + b4_ref[...], 0.0)

    # layer 5, transposed: (1, D4) . (tile, D4)^T -> (1, tile).  Kept fully
    # f32 (it is tiny) so the Q head does not pick up extra bf16 rounding.
    q_t = lax.dot_general(w5t_ref[...], h4,
                          dimension_numbers=(((1,), (1,)), ((), ())),
                          preferred_element_type=f32) + b5_ref[...]
    out_ref[...] = q_t.astype(out_ref.dtype)


def _pick_batch_tile(B, row_mult, cap=2048):
    """Pick rows-per-grid-step.

    Small batches: a single step with minimal (sublane-aligned) padding.
    Larger batches: 128-aligned tiles (the tile is the LANE dim of the
    transposed output), as large as possible up to `cap`, with an EVEN number
    of grid steps so v7x's two TensorCores split the 'parallel' axis evenly.
    """
    if B <= 256:
        return _round_up(B, row_mult)
    steps = 2
    while _round_up(-(-B // steps), 128) > cap:
        steps += 2
    return _round_up(-(-B // steps), 128)


def prepare_params(params, compute_dtype=jnp.bfloat16):
    """One-time packing / casting of the raw (in,out)-layout Linear params into
    the kernel layout.  Hoisted out of the forward hot path (call once)."""
    w1, b1, w2, b2, w3, b3, w4, b4, w5, b5 = params
    d0, d1 = w1.shape
    d1a, d2 = w2.shape
    w2x, w2a = w2[:d1], w2[d1:]
    da = d1a - d1

    # block-diagonal [[W1, 0], [0, W2a]]: one matmul computes x@W1 and a@W2a
    wp = jnp.zeros((d0 + da, d1 + d2), jnp.float32)
    wp = wp.at[:d0, :d1].set(w1).at[d0:, d1:].set(w2a)

    cast = lambda w: w.astype(compute_dtype)
    return (cast(wp), b1,
            cast(w2x), b2,
            cast(w3), b3,
            cast(w4), b4,
            w5.T,                  # (1, D4), kept f32
            b5.reshape(1, 1))      # scalar bias, f32


def critic_forward(x, actions, kparams, *, batch_tile=None):
    """Critic MLP as one Pallas kernel, pipelined over the batch.
    `kparams` is the output of `prepare_params`."""
    (wp, b1, w2x, b2, w3, b3, w4, b4, w5t, b5) = kparams
    B = x.shape[0]
    cdt = wp.dtype
    row_mult = 16 if cdt == jnp.bfloat16 else 8

    if batch_tile is None:
        batch_tile = _pick_batch_tile(B, row_mult)

    Bp = _round_up(B, batch_tile)
    xa = jnp.concatenate([x, actions], axis=-1).astype(cdt)     # (B, D0 + DA)
    if Bp != B:
        xa = jnp.pad(xa, ((0, Bp - B), (0, 0)))
    Dxa = xa.shape[1]

    grid = (Bp // batch_tile,)

    def full(arr):
        zeros = (0,) * arr.ndim
        return pl.BlockSpec(arr.shape, lambda i, _z=zeros: _z)

    out_t = pl.pallas_call(
        critic_kernel,
        out_shape=jax.ShapeDtypeStruct((1, Bp), jnp.float32),
        grid_spec=pltpu.PrefetchScalarGridSpec(
            num_scalar_prefetch=0,
            grid=grid,
            in_specs=[
                pl.BlockSpec((batch_tile, Dxa), lambda i: (i, 0)),
                full(wp), full(b1),
                full(w2x), full(b2),
                full(w3), full(b3),
                full(w4), full(b4),
                full(w5t), full(b5),
            ],
            out_specs=pl.BlockSpec((1, batch_tile), lambda i: (0, i)),
        ),
        compiler_params=pltpu.CompilerParams(
            dimension_semantics=("parallel",),
            vmem_limit_bytes=32 * 1024 * 1024),
    )(xa, wp, b1, w2x, b2, w3, b3, w4, b4, w5t, b5)

    # real Q values are the first B columns of the (1, Bp) transposed output
    return out_t[0, :B].reshape(B, 1)


def init_params(key, mlp_layers, action_num):
    """Deterministic synthetic params (f32). Weights (in, out); biases (1, out)."""
    d0, d1, d2, d3, d4 = mlp_layers
    da = 4 * action_num

    def lin(k, fan_in, fan_out):
        kw, kb = jax.random.split(k)
        bound = 1.0 / jnp.sqrt(fan_in)
        w = jax.random.uniform(kw, (fan_in, fan_out), jnp.float32, -bound, bound)
        b = jax.random.uniform(kb, (1, fan_out), jnp.float32, -bound, bound)
        return w, b

    k1, k2, k3, k4, k5 = jax.random.split(key, 5)
    w1, b1 = lin(k1, d0, d1)
    w2, b2 = lin(k2, d1 + da, d2)       # linear2 acts on concat([h1, actions])
    w3, b3 = lin(k3, d2, d3)
    w4, b4 = lin(k4, d3, d4)
    w5, b5 = lin(k5, d4, 1)
    return (w1, b1, w2, b2, w3, b3, w4, b4, w5, b5)


def critic_reference(x, actions, params):
    w1, b1, w2, b2, w3, b3, w4, b4, w5, b5 = params
    h1 = jax.nn.relu(x @ w1 + b1)
    xa = jnp.concatenate([h1, actions], axis=-1)
    h2 = jax.nn.relu(xa @ w2 + b2)
    h3 = jax.nn.relu(h2 @ w3 + b3)
    h4 = jax.nn.relu(h3 @ w4 + b4)
    return h4 @ w5 + b5


if __name__ == "__main__":
    # Small shapes consistent with the module's forward.
    mlp_layers = [64, 128, 128, 64, 32]
    action_num = 8                        # actions dim = 4 * action_num = 32
    batch = 8

    key = jax.random.PRNGKey(0)
    kx, ka, kp = jax.random.split(key, 3)
    x = jax.random.normal(kx, (batch, mlp_layers[0]), jnp.float32)
    actions = jax.random.normal(ka, (batch, 4 * action_num), jnp.float32)
    raw_params = init_params(kp, mlp_layers, action_num)
    q_ref = critic_reference(x, actions, raw_params)

    # 1) f32 compute path: tight check against the reference.
    kparams_f32 = prepare_params(raw_params, jnp.float32)
    q_f32 = jax.block_until_ready(critic_forward(x, actions, kparams_f32))
    assert q_f32.shape == (batch, 1)
    assert jnp.allclose(q_f32, q_ref, atol=1e-4, rtol=1e-4), "f32 mismatch vs reference"

    # 2) bf16-operand path (production config): loose tolerance for bf16 rounding.
    kparams_bf16 = prepare_params(raw_params, jnp.bfloat16)
    q_bf16 = jax.block_until_ready(critic_forward(x, actions, kparams_bf16))
    assert q_bf16.shape == (batch, 1)
    assert jnp.allclose(q_bf16, q_ref, atol=5e-2, rtol=5e-2), "bf16 mismatch vs reference"

    # 3) Multi-step grid (2 even steps) + batch padding (300 -> 512).
    batch2 = 300
    kx2, ka2 = jax.random.split(jax.random.PRNGKey(1), 2)
    x2 = jax.random.normal(kx2, (batch2, mlp_layers[0]), jnp.float32)
    a2 = jax.random.normal(ka2, (batch2, 4 * action_num), jnp.float32)
    q2 = jax.block_until_ready(critic_forward(x2, a2, kparams_bf16))
    q2_ref = critic_reference(x2, a2, raw_params)
    assert q2.shape == (batch2, 1)
    assert jnp.allclose(q2, q2_ref, atol=5e-2, rtol=5e-2), "padded-batch mismatch vs reference"

    print("KERNEL_OK")
</pallas_src>

<mosaic_0001>
module attributes {stable_mosaic.version = 11 : i64} {
  func.func @critic_kernel(%arg0: i32, %arg1: memref<8x96xf32, #tpu.memory_space<vmem>>, %arg2: memref<96x256xf32, #tpu.memory_space<vmem>>, %arg3: memref<1x128xf32, #tpu.memory_space<vmem>>, %arg4: memref<128x128xf32, #tpu.memory_space<vmem>>, %arg5: memref<1x128xf32, #tpu.memory_space<vmem>>, %arg6: memref<128x64xf32, #tpu.memory_space<vmem>>, %arg7: memref<1x64xf32, #tpu.memory_space<vmem>>, %arg8: memref<64x32xf32, #tpu.memory_space<vmem>>, %arg9: memref<1x32xf32, #tpu.memory_space<vmem>>, %arg10: memref<1x32xf32, #tpu.memory_space<vmem>>, %arg11: memref<1x1xf32, #tpu.memory_space<vmem>>, %arg12: memref<1x8xf32, #tpu.memory_space<vmem>>) attributes {dimension_semantics = [#tpu.dimension_semantics<parallel>], iteration_bounds = array<i64: 1>, scalar_prefetch = 0 : i64, scratch_operands = 0 : i64, tpu.core_type = #tpu.core_type<tc>, window_params = [{transform_indices = @transform_0, window_bounds = array<i64: 8, 96>}, {pipeline_mode = #tpu.pipeline_mode<synchronous>, transform_indices = @transform_1, window_bounds = array<i64: 96, 256>}, {pipeline_mode = #tpu.pipeline_mode<synchronous>, transform_indices = @transform_2, window_bounds = array<i64: 1, 128>}, {pipeline_mode = #tpu.pipeline_mode<synchronous>, transform_indices = @transform_3, window_bounds = array<i64: 128, 128>}, {pipeline_mode = #tpu.pipeline_mode<synchronous>, transform_indices = @transform_4, window_bounds = array<i64: 1, 128>}, {pipeline_mode = #tpu.pipeline_mode<synchronous>, transform_indices = @transform_5, window_bounds = array<i64: 128, 64>}, {pipeline_mode = #tpu.pipeline_mode<synchronous>, transform_indices = @transform_6, window_bounds = array<i64: 1, 64>}, {pipeline_mode = #tpu.pipeline_mode<synchronous>, transform_indices = @transform_7, window_bounds = array<i64: 64, 32>}, {pipeline_mode = #tpu.pipeline_mode<synchronous>, transform_indices = @transform_8, window_bounds = array<i64: 1, 32>}, {pipeline_mode = #tpu.pipeline_mode<synchronous>, transform_indices = @transform_9, window_bounds = array<i64: 1, 32>}, {pipeline_mode = #tpu.pipeline_mode<synchronous>, transform_indices = @transform_10, window_bounds = array<i64: 1, 1>}, {transform_indices = @transform_11, window_bounds = array<i64: 1, 8>}]} {
    %c0 = arith.constant 0 : index
    %c0_0 = arith.constant 0 : index
    %0 = vector.load %arg1[%c0, %c0_0] : memref<8x96xf32, #tpu.memory_space<vmem>>, vector<8x96xf32>
    %c0_1 = arith.constant 0 : index
    %c0_2 = arith.constant 0 : index
    %1 = vector.load %arg2[%c0_1, %c0_2] : memref<96x256xf32, #tpu.memory_space<vmem>>, vector<96x256xf32>
    %cst = arith.constant dense<0.000000e+00> : vector<8x256xf32>
    %2 = tpu.matmul %0, %1, %cst {dimension_numbers = #tpu.dot_dimension_numbers<[1], [0], [0], [1], [0, 0, 1, 1], [], []>} : vector<8x96xf32>, vector<96x256xf32>, vector<8x256xf32> -> vector<8x256xf32>
    %3 = vector.extract_strided_slice %2 {offsets = [0, 0], sizes = [8, 128], strides = [1, 1]} : vector<8x256xf32> to vector<8x128xf32>
    %c0_3 = arith.constant 0 : index
    %c0_4 = arith.constant 0 : index
    %4 = vector.load %arg3[%c0_3, %c0_4] : memref<1x128xf32, #tpu.memory_space<vmem>>, vector<1x128xf32>
    %5 = vector.broadcast %4 : vector<1x128xf32> to vector<8x128xf32>
    %6 = arith.addf %3, %5 : vector<8x128xf32>
    %cst_5 = arith.constant 0.000000e+00 : f32
    %7 = vector.broadcast %cst_5 : f32 to vector<8x128xf32>
    %8 = arith.maximumf %6, %7 : vector<8x128xf32>
    %9 = vector.extract_strided_slice %2 {offsets = [0, 128], sizes = [8, 128], strides = [1, 1]} : vector<8x256xf32> to vector<8x128xf32>
    %c0_6 = arith.constant 0 : index
    %c0_7 = arith.constant 0 : index
    %10 = vector.load %arg4[%c0_6, %c0_7] : memref<128x128xf32, #tpu.memory_space<vmem>>, vector<128x128xf32>
    %cst_8 = arith.constant dense<0.000000e+00> : vector<8x128xf32>
    %11 = tpu.matmul %8, %10, %cst_8 {dimension_numbers = #tpu.dot_dimension_numbers<[1], [0], [0], [1], [0, 0, 1, 1], [], []>} : vector<8x128xf32>, vector<128x128xf32>, vector<8x128xf32> -> vector<8x128xf32>
    %12 = arith.addf %11, %9 : vector<8x128xf32>
    %c0_9 = arith.constant 0 : index
    %c0_10 = arith.constant 0 : index
    %13 = vector.load %arg5[%c0_9, %c0_10] : memref<1x128xf32, #tpu.memory_space<vmem>>, vector<1x128xf32>
    %14 = vector.broadcast %13 : vector<1x128xf32> to vector<8x128xf32>
    %15 = arith.addf %12, %14 : vector<8x128xf32>
    %cst_11 = arith.constant 0.000000e+00 : f32
    %16 = vector.broadcast %cst_11 : f32 to vector<8x128xf32>
    %17 = arith.maximumf %15, %16 : vector<8x128xf32>
    %c0_12 = arith.constant 0 : index
    %c0_13 = arith.constant 0 : index
    %18 = vector.load %arg6[%c0_12, %c0_13] : memref<128x64xf32, #tpu.memory_space<vmem>>, vector<128x64xf32>
    %cst_14 = arith.constant dense<0.000000e+00> : vector<8x64xf32>
    %19 = tpu.matmul %17, %18, %cst_14 {dimension_numbers = #tpu.dot_dimension_numbers<[1], [0], [0], [1], [0, 0, 1, 1], [], []>} : vector<8x128xf32>, vector<128x64xf32>, vector<8x64xf32> -> vector<8x64xf32>
    %c0_15 = arith.constant 0 : index
    %c0_16 = arith.constant 0 : index
    %20 = vector.load %arg7[%c0_15, %c0_16] : memref<1x64xf32, #tpu.memory_space<vmem>>, vector<1x64xf32>
    %21 = vector.broadcast %20 : vector<1x64xf32> to vector<8x64xf32>
    %22 = arith.addf %19, %21 : vector<8x64xf32>
    %cst_17 = arith.constant 0.000000e+00 : f32
    %23 = vector.broadcast %cst_17 : f32 to vector<8x64xf32>
    %24 = arith.maximumf %22, %23 : vector<8x64xf32>
    %c0_18 = arith.constant 0 : index
    %c0_19 = arith.constant 0 : index
    %25 = vector.load %arg8[%c0_18, %c0_19] : memref<64x32xf32, #tpu.memory_space<vmem>>, vector<64x32xf32>
    %cst_20 = arith.constant dense<0.000000e+00> : vector<8x32xf32>
    %26 = tpu.matmul %24, %25, %cst_20 {dimension_numbers = #tpu.dot_dimension_numbers<[1], [0], [0], [1], [0, 0, 1, 1], [], []>} : vector<8x64xf32>, vector<64x32xf32>, vector<8x32xf32> -> vector<8x32xf32>
    %c0_21 = arith.constant 0 : index
    %c0_22 = arith.constant 0 : index
    %27 = vector.load %arg9[%c0_21, %c0_22] : memref<1x32xf32, #tpu.memory_space<vmem>>, vector<1x32xf32>
    %28 = vector.broadcast %27 : vector<1x32xf32> to vector<8x32xf32>
    %29 = arith.addf %26, %28 : vector<8x32xf32>
    %cst_23 = arith.constant 0.000000e+00 : f32
    %30 = vector.broadcast %cst_23 : f32 to vector<8x32xf32>
    %31 = arith.maximumf %29, %30 : vector<8x32xf32>
    %c0_24 = arith.constant 0 : index
    %c0_25 = arith.constant 0 : index
    %32 = vector.load %arg10[%c0_24, %c0_25] : memref<1x32xf32, #tpu.memory_space<vmem>>, vector<1x32xf32>
    %cst_26 = arith.constant dense<0.000000e+00> : vector<1x8xf32>
    %33 = tpu.matmul %32, %31, %cst_26 {dimension_numbers = #tpu.dot_dimension_numbers<[1], [1], [0], [0], [0, 0, 1, 0], [], []>} : vector<1x32xf32>, vector<8x32xf32>, vector<1x8xf32> -> vector<1x8xf32>
    %c0_27 = arith.constant 0 : index
    %c0_28 = arith.constant 0 : index
    %34 = vector.load %arg11[%c0_27, %c0_28] : memref<1x1xf32, #tpu.memory_space<vmem>>, vector<1x1xf32>
    %35 = vector.broadcast %34 : vector<1x1xf32> to vector<1x8xf32>
    %36 = arith.addf %33, %35 : vector<1x8xf32>
    %c0_29 = arith.constant 0 : index
    %c0_30 = arith.constant 0 : index
    %37 = vector.load %arg12[%c0_29, %c0_30] : memref<1x8xf32, #tpu.memory_space<vmem>>, vector<1x8xf32>
    tpu.vector_store %arg12[%c0_29, %c0_30], %36 {strides = array<i32>} : memref<1x8xf32, #tpu.memory_space<vmem>>, vector<1x8xf32>,
    return
  }
  func.func @transform_0(%arg0: i32) -> (i32, i32) {
    %c0_i32 = arith.constant 0 : i32
    %c0_i32_0 = arith.constant 0 : i32
    return %arg0, %c0_i32 : i32, i32
  }
  func.func @transform_1(%arg0: i32) -> (i32, i32) {
    %c0_i32 = arith.constant 0 : i32
    %c0_i32_0 = arith.constant 0 : i32
    %c0_i32_1 = arith.constant 0 : i32
    return %c0_i32, %c0_i32_0 : i32, i32
  }
  func.func @transform_2(%arg0: i32) -> (i32, i32) {
    %c0_i32 = arith.constant 0 : i32
    %c0_i32_0 = arith.constant 0 : i32
    %c0_i32_1 = arith.constant 0 : i32
    return %c0_i32, %c0_i32_0 : i32, i32
  }
  func.func @transform_3(%arg0: i32) -> (i32, i32) {
    %c0_i32 = arith.constant 0 : i32
    %c0_i32_0 = arith.constant 0 : i32
    %c0_i32_1 = arith.constant 0 : i32
    return %c0_i32, %c0_i32_0 : i32, i32
  }
  func.func @transform_4(%arg0: i32) -> (i32, i32) {
    %c0_i32 = arith.constant 0 : i32
    %c0_i32_0 = arith.constant 0 : i32
    %c0_i32_1 = arith.constant 0 : i32
    return %c0_i32, %c0_i32_0 : i32, i32
  }
  func.func @transform_5(%arg0: i32) -> (i32, i32) {
    %c0_i32 = arith.constant 0 : i32
    %c0_i32_0 = arith.constant 0 : i32
    %c0_i32_1 = arith.constant 0 : i32
    return %c0_i32, %c0_i32_0 : i32, i32
  }
  func.func @transform_6(%arg0: i32) -> (i32, i32) {
    %c0_i32 = arith.constant 0 : i32
    %c0_i32_0 = arith.constant 0 : i32
    %c0_i32_1 = arith.constant 0 : i32
    return %c0_i32, %c0_i32_0 : i32, i32
  }
  func.func @transform_7(%arg0: i32) -> (i32, i32) {
    %c0_i32 = arith.constant 0 : i32
    %c0_i32_0 = arith.constant 0 : i32
    %c0_i32_1 = arith.constant 0 : i32
    return %c0_i32, %c0_i32_0 : i32, i32
  }
  func.func @transform_8(%arg0: i32) -> (i32, i32) {
    %c0_i32 = arith.constant 0 : i32
    %c0_i32_0 = arith.constant 0 : i32
    %c0_i32_1 = arith.constant 0 : i32
    return %c0_i32, %c0_i32_0 : i32, i32
  }
  func.func @transform_9(%arg0: i32) -> (i32, i32) {
    %c0_i32 = arith.constant 0 : i32
    %c0_i32_0 = arith.constant 0 : i32
    %c0_i32_1 = arith.constant 0 : i32
    return %c0_i32, %c0_i32_0 : i32, i32
  }
  func.func @transform_10(%arg0: i32) -> (i32, i32) {
    %c0_i32 = arith.constant 0 : i32
    %c0_i32_0 = arith.constant 0 : i32
    %c0_i32_1 = arith.constant 0 : i32
    return %c0_i32, %c0_i32_0 : i32, i32
  }
  func.func @transform_11(%arg0: i32) -> (i32, i32) {
    %c0_i32 = arith.constant 0 : i32
    %c0_i32_0 = arith.constant 0 : i32
    return %c0_i32, %arg0 : i32, i32
  }
}

</mosaic_0001>

<llo_original>
// kernel: tpu_custom_call.1
$region0: #{tpu_custom_call.1}
  #allocation0 [shape = 'u32[]', space=smem, size = 0x4, offset = 0x4, fixed_abs, tag = 'smem constant byte address 0x4 - core index']
  #allocation1 [shape = 'u32[144,128]{1,0:T(1,128)}', space=vmem, size = 0x12000, scoped, tag = 'internal scratch']
  #allocation2 [shape = 'f32[1,1]{1,0:T(1,128)S(1)}', space=vmem, size = 0x200, scoped, tag = 'scoped memory for tpu_custom_call.1']
  %s0 = inlined_call_operand.vmem [shape: f32[8,96], index: 0, kind: input, shape index: {}]
  %s1 = inlined_call_operand.vmem [shape: f32[96,256], index: 1, kind: input, shape index: {}]
  %s2 = inlined_call_operand.vmem [shape: f32[1,128], index: 2, kind: input, shape index: {}]
  %s3 = inlined_call_operand.hbm [shape: f32[128,128], index: 3, kind: input, shape index: {}]
  %s4 = inlined_call_operand.vmem [shape: f32[1,128], index: 4, kind: input, shape index: {}]
  %s5 = inlined_call_operand.vmem [shape: f32[128,64], index: 5, kind: input, shape index: {}]
  %s6 = inlined_call_operand.vmem [shape: f32[1,64], index: 6, kind: input, shape index: {}]
  %s7 = inlined_call_operand.vmem [shape: f32[64,32], index: 7, kind: input, shape index: {}]
  %s8 = inlined_call_operand.vmem [shape: f32[1,32], index: 8, kind: input, shape index: {}]
  %s9 = inlined_call_operand.vmem [shape: f32[1,32], index: 9, kind: input, shape index: {}]
  %s10 = inlined_call_operand.<no memory space> [shape: f32[1,1], index: 10, kind: input, shape index: {}]
  %s11 = inlined_call_operand.hbm [shape: f32[1,8], index: 11, kind: output, shape index: {}]
  %s12 = sld [smem:[#allocation0]]
  $region58: #{tpu_custom_call.1} parent=0
    _
  %s14 = ssub.s32 1, %s12
  %s15 = scalar_select 0, %s14, %s12
  %v16 = vstv %s10
  %17 = vst [vmem:[#allocation2] sm:$0x1] %v16
  $region1: #{tpu_custom_call.1} parent=0
    #allocation3 [shape = 'u8[65536]{0}', space=vmem, size = 0x10000, scoped, tag = 'input window, operand 3, single buffered']
    #allocation4 [shape = 's32[1]{0}', space=sflag, size = 0x4, scoped, tag = 'scoped memory for tpu_custom_call.1']
    #allocation5 [shape = 's32[1]{0}', space=sflag, size = 0x4, scoped, tag = 'scoped memory for tpu_custom_call.1']
    #allocation6 [shape = 'u8[512]{0}', space=vmem, size = 0x400, scoped, tag = 'output window, operand 0, single buffered']
    %18 = vsyncpa [#allocation4], 0
    %19 = vsyncpa [#allocation5], 0
    // Predicated region
    $region2: #{tpu_custom_call.1} parent=1 // pred_check
      _
    $region3: #{tpu_custom_call.1} parent=1 // pred_check_branch
      %21 = sbr.rel (0) target = $region5
    $region4: #{tpu_custom_call.1} parent=1 // pred_region
      _
    $region5: #{tpu_custom_call.1} parent=1 // pred_fallthru
      _
    // Predicated region
    $region6: #{tpu_custom_call.1} parent=1 // pred_check
      _
    $region7: #{tpu_custom_call.1} parent=1 // pred_check_branch
      %23 = sbr.rel (0) target = $region9
    $region8: #{tpu_custom_call.1} parent=1 // pred_region
      _
    $region9: #{tpu_custom_call.1} parent=1 // pred_fallthru
      _
    // Predicated region
    $region10: #{tpu_custom_call.1} parent=1 // pred_check
      _
    $region11: #{tpu_custom_call.1} parent=1 // pred_check_branch
      %25 = sbr.rel (0) target = $region13
    $region12: #{tpu_custom_call.1} parent=1 // pred_region
      _
    $region13: #{tpu_custom_call.1} parent=1 // pred_fallthru
      _
    // Predicated region
    $region14: #{tpu_custom_call.1} parent=1 // pred_check
      _
    $region15: #{tpu_custom_call.1} parent=1 // pred_check_branch
      %27 = sbr.rel (0) target = $region17
    $region16: #{tpu_custom_call.1} parent=1 // pred_region
      %s29 = ssub.s32 2048, 2048
      %30 = vsyncadd [#allocation4], %s29
      %s31 = sshll.u32 [#allocation3], 4
      %s32 = int_to_ptr.vmem [resolvable:$true] %s31
      %37 = dma.hbm_to_vmem [thread:$0]  %s3, 2048, %s32, [#allocation4], 128, 128, 8
    $region17: #{tpu_custom_call.1} parent=1 // pred_fallthru
      _
    // Predicated region
    $region18: #{tpu_custom_call.1} parent=1 // pred_check
      _
    $region19: #{tpu_custom_call.1} parent=1 // pred_check_branch
      %39 = sbr.rel (0) target = $region21
    $region20: #{tpu_custom_call.1} parent=1 // pred_region
      _
    $region21: #{tpu_custom_call.1} parent=1 // pred_fallthru
      _
    // Predicated region
    $region22: #{tpu_custom_call.1} parent=1 // pred_check
      _
    $region23: #{tpu_custom_call.1} parent=1 // pred_check_branch
      %41 = sbr.rel (0) target = $region25
    $region24: #{tpu_custom_call.1} parent=1 // pred_region
      _
    $region25: #{tpu_custom_call.1} parent=1 // pred_fallthru
      _
    // Predicated region
    $region26: #{tpu_custom_call.1} parent=1 // pred_check
      _
    $region27: #{tpu_custom_call.1} parent=1 // pred_check_branch
      %43 = sbr.rel (0) target = $region29
    $region28: #{tpu_custom_call.1} parent=1 // pred_region
      _
    $region29: #{tpu_custom_call.1} parent=1 // pred_fallthru
      _
    // Predicated region
    $region30: #{tpu_custom_call.1} parent=1 // pred_check
      _
    $region31: #{tpu_custom_call.1} parent=1 // pred_check_branch
      %45 = sbr.rel (0) target = $region33
    $region32: #{tpu_custom_call.1} parent=1 // pred_region
      _
    $region33: #{tpu_custom_call.1} parent=1 // pred_fallthru
      _
    // Predicated region
    $region34: #{tpu_custom_call.1} parent=1 // pred_check
      _
    $region35: #{tpu_custom_call.1} parent=1 // pred_check_branch
      %47 = sbr.rel (0) target = $region37
    $region36: #{tpu_custom_call.1} parent=1 // pred_region
      _
    $region37: #{tpu_custom_call.1} parent=1 // pred_fallthru
      _
    // Predicated region
    $region38: #{tpu_custom_call.1} parent=1 // pred_check
      _
    $region39: #{tpu_custom_call.1} parent=1 // pred_check_branch
      %49 = sbr.rel (0) target = $region41
    $region40: #{tpu_custom_call.1} parent=1 // pred_region
      _
    $region41: #{tpu_custom_call.1} parent=1 // pred_fallthru
      _
    // Predicated region
    $region42: #{tpu_custom_call.1} parent=1 // pred_check
      _
    $region43: #{tpu_custom_call.1} parent=1 // pred_check_branch
      %51 = sbr.rel (0) target = $region45
    $region44: #{tpu_custom_call.1} parent=1 // pred_region
      _
    $region45: #{tpu_custom_call.1} parent=1 // pred_fallthru
      _
    // Predicated region
    $region46: #{tpu_custom_call.1} parent=1 // pred_check
      _
    $region47: #{tpu_custom_call.1} parent=1 // pred_check_branch
      %53 = sbr.rel (0) target = $region49
    $region48: #{tpu_custom_call.1} parent=1 // pred_region
      %54 = dma.done [#allocation4], 2048
    $region49: #{tpu_custom_call.1} parent=1 // pred_fallthru
      _
    %v55 = vld [vmem:[%s0] sm:$0xff]
    %v56 = vld [vmem:[%s1] sm:$0xff]
    %v57 = vld [vmem:[%s1 + $0x8] sm:$0xff]
    %v58 = vld [vmem:[%s1 + $0x10] sm:$0xff]
    %v59 = vld [vmem:[%s1 + $0x18] sm:$0xff]
    %v60 = vld [vmem:[%s1 + $0x20] sm:$0xff]
    %v61 = vld [vmem:[%s1 + $0x28] sm:$0xff]
    %v62 = vld [vmem:[%s1 + $0x30] sm:$0xff]
    %v63 = vld [vmem:[%s1 + $0x38] sm:$0xff]
    %v64 = vld [vmem:[%s1 + $0x40] sm:$0xff]
    %v65 = vld [vmem:[%s1 + $0x48] sm:$0xff]
    %v66 = vld [vmem:[%s1 + $0x50] sm:$0xff]
    %v67 = vld [vmem:[%s1 + $0x58] sm:$0xff]
    %v68 = vld [vmem:[%s1 + $0x60] sm:$0xff]
    %v69 = vld [vmem:[%s1 + $0x68] sm:$0xff]
    %v70 = vld [vmem:[%s1 + $0x70] sm:$0xff]
    %v71 = vld [vmem:[%s1 + $0x78] sm:$0xff]
    %v72 = vld [vmem:[%s1 + $0x80] sm:$0xff]
    %v73 = vld [vmem:[%s1 + $0x88] sm:$0xff]
    %v74 = vld [vmem:[%s1 + $0x90] sm:$0xff]
    %v75 = vld [vmem:[%s1 + $0x98] sm:$0xff]
    %v76 = vld [vmem:[%s1 + $0xa0] sm:$0xff]
    %v77 = vld [vmem:[%s1 + $0xa8] sm:$0xff]
    %v78 = vld [vmem:[%s1 + $0xb0] sm:$0xff]
    %v79 = vld [vmem:[%s1 + $0xb8] sm:$0xff]
    %vm80 = vcmask 785408
    %v82 = vsel %vm80, %v55, 0
    %84 = vmatprep.subr.mxu0 0.0
    %85 = vmatpush1.msra.mxu0 0.0
    %86 = vmatprep.subr.mxu0 0.0
    %87 = vmatpush1.msra.mxu0 0.0
    %88 = vmatprep.subr.mxu0 0.0
    %89 = vmatpush1.msra.mxu0 0.0
    %90 = vmatprep.subr.mxu0 0.0
    %91 = vmatpush1.msra.mxu0 0.0
    %92 = vmatprep.subr.mxu0 %v79
    %93 = vmatpush1.msra.mxu0 %v78
    %94 = vmatprep.subr.mxu0 %v77
    %95 = vmatpush1.msra.mxu0 %v76
    %96 = vmatprep.subr.mxu0 %v75
    %97 = vmatpush1.msra.mxu0 %v74
    %98 = vmatprep.subr.mxu0 %v73
    %99 = vmatpush1.msra.mxu0 %v72
    %100 = vmatprep.subr.mxu0 %v71
    %101 = vmatpush1.msra.mxu0 %v70
    %102 = vmatprep.subr.mxu0 %v69
    %103 = vmatpush1.msra.mxu0 %v68
    %104 = vmatprep.subr.mxu0 %v67
    %105 = vmatpush1.msra.mxu0 %v66
    %106 = vmatprep.subr.mxu0 %v65
    %107 = vmatpush1.msra.mxu0 %v64
    %108 = vmatprep.subr.mxu0 %v63
    %109 = vmatpush1.msra.mxu0 %v62
    %110 = vmatprep.subr.mxu0 %v61
    %111 = vmatpush1.msra.mxu0 %v60
    %112 = vmatprep.subr.mxu0 %v59
    %113 = vmatpush1.msra.mxu0 %v58
    %114 = vmatprep.subr.mxu0 %v57
    %115 = vmatpush1.msra.mxu0 %v56
    %116 = vmatprep.subr.mxu0 0.0
    %117 = vmatpush2.msra.mxu0 0.0
    %118 = vmatprep.subr.mxu0 0.0
    %119 = vmatpush2.msra.mxu0 0.0
    %120 = vmatprep.subr.mxu0 0.0
    %121 = vmatpush2.msra.mxu0 0.0
    %122 = vmatprep.subr.mxu0 0.0
    %123 = vmatpush2.msra.mxu0 0.0
    %124 = vmatprep.subr.mxu0 0.0
    %125 = vmatpush2.msra.mxu0 0.0
    %126 = vmatprep.subr.mxu0 0.0
    %127 = vmatpush2.msra.mxu0 0.0
    %128 = vmatprep.subr.mxu0 0.0
    %129 = vmatpush2.msra.mxu0 0.0
    %130 = vmatprep.subr.mxu0 0.0
    %131 = vmatpush2.msra.mxu0 0.0
    %132 = vmatprep.subr.mxu0 0.0
    %133 = vmatpush2.msra.mxu0 0.0
    %134 = vmatprep.subr.mxu0 0.0
    %135 = vmatpush2.msra.mxu0 0.0
    %136 = vmatprep.subr.mxu0 0.0
    %137 = vmatpush2.msra.mxu0 0.0
    %138 = vmatprep.subr.mxu0 0.0
    %139 = vmatpush2.msra.mxu0 0.0
    %140 = vmatprep.subr.mxu0 0.0
    %141 = vmatpush2.msra.mxu0 0.0
    %142 = vmatprep.subr.mxu0 0.0
    %143 = vmatpush2.msra.mxu0 0.0
    %144 = vmatprep.subr.mxu0 0.0
    %145 = vmatpush2.msra.mxu0 0.0
    %146 = vmatprep.subr.mxu0 0.0
    %147 = vmatpush2.msra.mxu0 0.0
    %148 = vmatprep.mubr.f32.mxu0 0.0
    %149 = vmatmul.mubr.f32.gmra.mxu0 %v82
    %v150 = vpop.f32.mrf.mxu0
    %v151 = vadd.f32 0.0, %v150
    %v152 = vpop.f32.mrf.mxu0
    %v153 = vadd.f32 0.0, %v152
    %154 = vdwg.mxu0
    %v155 = vld [vmem:[%s2] sm:$0x1]
    %v157 = vlaneseq
    %v158 = vshrl.u32 %v157, 7
    %v159 = vsub.s32 0, %v158
    %v160 = vrot.slane %v155, %v159
    %v162 = vadd.f32 %v151, %v160
    %v163 = vmax.f32 %v162, 0.0
    %v164 = vld [vmem:[#allocation3] sm:$0xff]
    %v165 = vld [vmem:[#allocation3 + $0x8] sm:$0xff]
    %v166 = vld [vmem:[#allocation3 + $0x10] sm:$0xff]
    %v167 = vld [vmem:[#allocation3 + $0x18] sm:$0xff]
    %v168 = vld [vmem:[#allocation3 + $0x20] sm:$0xff]
    %v169 = vld [vmem:[#allocation3 + $0x28] sm:$0xff]
    %v170 = vld [vmem:[#allocation3 + $0x30] sm:$0xff]
    %v171 = vld [vmem:[#allocation3 + $0x38] sm:$0xff]
    %v172 = vld [vmem:[#allocation3 + $0x40] sm:$0xff]
    %v173 = vld [vmem:[#allocation3 + $0x48] sm:$0xff]
    %v174 = vld [vmem:[#allocation3 + $0x50] sm:$0xff]
    %v175 = vld [vmem:[#allocation3 + $0x58] sm:$0xff]
    %v176 = vld [vmem:[#allocation3 + $0x60] sm:$0xff]
    %v177 = vld [vmem:[#allocation3 + $0x68] sm:$0xff]
    %v178 = vld [vmem:[#allocation3 + $0x70] sm:$0xff]
    %v179 = vld [vmem:[#allocation3 + $0x78] sm:$0xff]
    %180 = vmatprep.subr.mxu0 0.0
    %181 = vmatpush1.msra.mxu0 %v179
    %182 = vmatprep.subr.mxu0 0.0
    %183 = vmatpush1.msra.mxu0 %v178
    %184 = vmatprep.subr.mxu0 0.0
    %185 = vmatpush1.msra.mxu0 %v177
    %186 = vmatprep.subr.mxu0 0.0
    %187 = vmatpush1.msra.mxu0 %v176
    %188 = vmatprep.subr.mxu0 0.0
    %189 = vmatpush1.msra.mxu0 %v175
    %190 = vmatprep.subr.mxu0 0.0
    %191 = vmatpush1.msra.mxu0 %v174
    %192 = vmatprep.subr.mxu0 0.0
    %193 = vmatpush1.msra.mxu0 %v173
    %194 = vmatprep.subr.mxu0 0.0
    %195 = vmatpush1.msra.mxu0 %v172
    %196 = vmatprep.subr.mxu0 0.0
    %197 = vmatpush1.msra.mxu0 %v171
    %198 = vmatprep.subr.mxu0 0.0
    %199 = vmatpush1.msra.mxu0 %v170
    %200 = vmatprep.subr.mxu0 0.0
    %201 = vmatpush1.msra.mxu0 %v169
    %202 = vmatprep.subr.mxu0 0.0
    %203 = vmatpush1.msra.mxu0 %v168
    %204 = vmatprep.subr.mxu0 0.0
    %205 = vmatpush1.msra.mxu0 %v167
    %206 = vmatprep.subr.mxu0 0.0
    %207 = vmatpush1.msra.mxu0 %v166
    %208 = vmatprep.subr.mxu0 0.0
    %209 = vmatpush1.msra.mxu0 %v165
    %210 = vmatprep.subr.mxu0 0.0
    %211 = vmatpush1.msra.mxu0 %v164
    %212 = vmatprep.subr.mxu0 0.0
    %213 = vmatpush2.msra.mxu0 0.0
    %214 = vmatprep.subr.mxu0 0.0
    %215 = vmatpush2.msra.mxu0 0.0
    %216 = vmatprep.subr.mxu0 0.0
    %217 = vmatpush2.msra.mxu0 0.0
    %218 = vmatprep.subr.mxu0 0.0
    %219 = vmatpush2.msra.mxu0 0.0
    %220 = vmatprep.subr.mxu0 0.0
    %221 = vmatpush2.msra.mxu0 0.0
    %222 = vmatprep.subr.mxu0 0.0
    %223 = vmatpush2.msra.mxu0 0.0
    %224 = vmatprep.subr.mxu0 0.0
    %225 = vmatpush2.msra.mxu0 0.0
    %226 = vmatprep.subr.mxu0 0.0
    %227 = vmatpush2.msra.mxu0 0.0
    %228 = vmatprep.subr.mxu0 0.0
    %229 = vmatpush2.msra.mxu0 0.0
    %230 = vmatprep.subr.mxu0 0.0
    %231 = vmatpush2.msra.mxu0 0.0
    %232 = vmatprep.subr.mxu0 0.0
    %233 = vmatpush2.msra.mxu0 0.0
    %234 = vmatprep.subr.mxu0 0.0
    %235 = vmatpush2.msra.mxu0 0.0
    %236 = vmatprep.subr.mxu0 0.0
    %237 = vmatpush2.msra.mxu0 0.0
    %238 = vmatprep.subr.mxu0 0.0
    %239 = vmatpush2.msra.mxu0 0.0
    %240 = vmatprep.subr.mxu0 0.0
    %241 = vmatpush2.msra.mxu0 0.0
    %242 = vmatprep.subr.mxu0 0.0
    %243 = vmatpush2.msra.mxu0 0.0
    %244 = vmatprep.mubr.f32.mxu0 0.0
    %245 = vmatmul.mubr.f32.gmra.mxu0 %v163
    %v246 = vpop.f32.mrf.mxu0
    %v247 = vadd.f32 %v153, %v246
    %v248 = vpop.f32.mrf.mxu0
    %249 = vdwg.mxu0
    %v250 = vld [vmem:[%s4] sm:$0x1]
    %v252 = vlaneseq
    %v253 = vshrl.u32 %v252, 7
    %v254 = vsub.s32 0, %v253
    %v255 = vrot.slane %v250, %v254
    %v257 = vadd.f32 %v247, %v255
    %v258 = vmax.f32 %v257, 0.0
    %v259 = vld [vmem:[%s5] sm:$0xff]
    %v260 = vld [vmem:[%s5 + $0x8] sm:$0xff]
    %v261 = vld [vmem:[%s5 + $0x10] sm:$0xff]
    %v262 = vld [vmem:[%s5 + $0x18] sm:$0xff]
    %v263 = vld [vmem:[%s5 + $0x20] sm:$0xff]
    %v264 = vld [vmem:[%s5 + $0x28] sm:$0xff]
    %v265 = vld [vmem:[%s5 + $0x30] sm:$0xff]
    %v266 = vld [vmem:[%s5 + $0x38] sm:$0xff]
    %v267 = vld [vmem:[%s5 + $0x40] sm:$0xff]
    %v268 = vld [vmem:[%s5 + $0x48] sm:$0xff]
    %v269 = vld [vmem:[%s5 + $0x50] sm:$0xff]
    %v270 = vld [vmem:[%s5 + $0x58] sm:$0xff]
    %v271 = vld [vmem:[%s5 + $0x60] sm:$0xff]
    %v272 = vld [vmem:[%s5 + $0x68] sm:$0xff]
    %v273 = vld [vmem:[%s5 + $0x70] sm:$0xff]
    %v274 = vld [vmem:[%s5 + $0x78] sm:$0xff]
    %v275 = vld [vmem:[%s6] sm:$0x1]
    %v277 = vlaneseq
    %v278 = vshrl.u32 %v277, 7
    %v279 = vsub.s32 0, %v278
    %v280 = vrot.slane %v275, %v279
    %282 = vmatprep.subr.mxu0 0.0
    %283 = vmatpush1.msra.mxu0 %v274
    %284 = vmatprep.subr.mxu0 0.0
    %285 = vmatpush1.msra.mxu0 %v273
    %286 = vmatprep.subr.mxu0 0.0
    %287 = vmatpush1.msra.mxu0 %v272
    %288 = vmatprep.subr.mxu0 0.0
    %289 = vmatpush1.msra.mxu0 %v271
    %290 = vmatprep.subr.mxu0 0.0
    %291 = vmatpush1.msra.mxu0 %v270
    %292 = vmatprep.subr.mxu0 0.0
    %293 = vmatpush1.msra.mxu0 %v269
    %294 = vmatprep.subr.mxu0 0.0
    %295 = vmatpush1.msra.mxu0 %v268
    %296 = vmatprep.subr.mxu0 0.0
    %297 = vmatpush1.msra.mxu0 %v267
    %298 = vmatprep.subr.mxu0 0.0
    %299 = vmatpush1.msra.mxu0 %v266
    %300 = vmatprep.subr.mxu0 0.0
    %301 = vmatpush1.msra.mxu0 %v265
    %302 = vmatprep.subr.mxu0 0.0
    %303 = vmatpush1.msra.mxu0 %v264
    %304 = vmatprep.subr.mxu0 0.0
    %305 = vmatpush1.msra.mxu0 %v263
    %306 = vmatprep.subr.mxu0 0.0
    %307 = vmatpush1.msra.mxu0 %v262
    %308 = vmatprep.subr.mxu0 0.0
    %309 = vmatpush1.msra.mxu0 %v261
    %310 = vmatprep.subr.mxu0 0.0
    %311 = vmatpush1.msra.mxu0 %v260
    %312 = vmatprep.subr.mxu0 0.0
    %313 = vmatpush1.msra.mxu0 %v259
    %314 = vmatprep.subr.mxu0 0.0
    %315 = vmatpush2.msra.mxu0 0.0
    %316 = vmatprep.subr.mxu0 0.0
    %317 = vmatpush2.msra.mxu0 0.0
    %318 = vmatprep.subr.mxu0 0.0
    %319 = vmatpush2.msra.mxu0 0.0
    %320 = vmatprep.subr.mxu0 0.0
    %321 = vmatpush2.msra.mxu0 0.0
    %322 = vmatprep.subr.mxu0 0.0
    %323 = vmatpush2.msra.mxu0 0.0
    %324 = vmatprep.subr.mxu0 0.0
    %325 = vmatpush2.msra.mxu0 0.0
    %326 = vmatprep.subr.mxu0 0.0
    %327 = vmatpush2.msra.mxu0 0.0
    %328 = vmatprep.subr.mxu0 0.0
    %329 = vmatpush2.msra.mxu0 0.0
    %330 = vmatprep.subr.mxu0 0.0
    %331 = vmatpush2.msra.mxu0 0.0
    %332 = vmatprep.subr.mxu0 0.0
    %333 = vmatpush2.msra.mxu0 0.0
    %334 = vmatprep.subr.mxu0 0.0
    %335 = vmatpush2.msra.mxu0 0.0
    %336 = vmatprep.subr.mxu0 0.0
    %337 = vmatpush2.msra.mxu0 0.0
    %338 = vmatprep.subr.mxu0 0.0
    %339 = vmatpush2.msra.mxu0 0.0
    %340 = vmatprep.subr.mxu0 0.0
    %341 = vmatpush2.msra.mxu0 0.0
    %342 = vmatprep.subr.mxu0 0.0
    %343 = vmatpush2.msra.mxu0 0.0
    %344 = vmatprep.subr.mxu0 0.0
    %345 = vmatpush2.msra.mxu0 0.0
    %346 = vmatprep.mubr.f32.mxu0 0.0
    %347 = vmatmul.mubr.f32.gmra.mxu0 %v258
    %v348 = vpop.f32.mrf.mxu0
    %v349 = vadd.f32 %v280, %v348
    %v350 = vpop.f32.mrf.mxu0
    %351 = vdwg.mxu0
    %v352 = vmax.f32 %v349, 0.0
    %v353 = vld [vmem:[%s7] sm:$0xff]
    %v354 = vld [vmem:[%s7 + $0x8] sm:$0xff]
    %v355 = vld [vmem:[%s7 + $0x10] sm:$0xff]
    %v356 = vld [vmem:[%s7 + $0x18] sm:$0xff]
    %v357 = vld [vmem:[%s7 + $0x20] sm:$0xff]
    %v358 = vld [vmem:[%s7 + $0x28] sm:$0xff]
    %v359 = vld [vmem:[%s7 + $0x30] sm:$0xff]
    %v360 = vld [vmem:[%s7 + $0x38] sm:$0xff]
    %v361 = vld [vmem:[%s8] sm:$0x1]
    %v363 = vlaneseq
    %v364 = vshrl.u32 %v363, 7
    %v365 = vsub.s32 0, %v364
    %v366 = vrot.slane %v361, %v365
    %vm368 = vcmask 523264
    %v370 = vsel %vm368, %v352, 0
    %372 = vmatprep.subr.mxu0 0.0
    %373 = vmatpush1.msra.mxu0 0.0
    %374 = vmatprep.subr.mxu0 0.0
    %375 = vmatpush1.msra.mxu0 0.0
    %376 = vmatprep.subr.mxu0 0.0
    %377 = vmatpush1.msra.mxu0 0.0
    %378 = vmatprep.subr.mxu0 0.0
    %379 = vmatpush1.msra.mxu0 0.0
    %380 = vmatprep.subr.mxu0 0.0
    %381 = vmatpush1.msra.mxu0 0.0
    %382 = vmatprep.subr.mxu0 0.0
    %383 = vmatpush1.msra.mxu0 0.0
    %384 = vmatprep.subr.mxu0 0.0
    %385 = vmatpush1.msra.mxu0 0.0
    %386 = vmatprep.subr.mxu0 0.0
    %387 = vmatpush1.msra.mxu0 0.0
    %388 = vmatprep.subr.mxu0 0.0
    %389 = vmatpush1.msra.mxu0 %v360
    %390 = vmatprep.subr.mxu0 0.0
    %391 = vmatpush1.msra.mxu0 %v359
    %392 = vmatprep.subr.mxu0 0.0
    %393 = vmatpush1.msra.mxu0 %v358
    %394 = vmatprep.subr.mxu0 0.0
    %395 = vmatpush1.msra.mxu0 %v357
    %396 = vmatprep.subr.mxu0 0.0
    %397 = vmatpush1.msra.mxu0 %v356
    %398 = vmatprep.subr.mxu0 0.0
    %399 = vmatpush1.msra.mxu0 %v355
    %400 = vmatprep.subr.mxu0 0.0
    %401 = vmatpush1.msra.mxu0 %v354
    %402 = vmatprep.subr.mxu0 0.0
    %403 = vmatpush1.msra.mxu0 %v353
    %404 = vmatprep.subr.mxu0 0.0
    %405 = vmatpush2.msra.mxu0 0.0
    %406 = vmatprep.subr.mxu0 0.0
    %407 = vmatpush2.msra.mxu0 0.0
    %408 = vmatprep.subr.mxu0 0.0
    %409 = vmatpush2.msra.mxu0 0.0
    %410 = vmatprep.subr.mxu0 0.0
    %411 = vmatpush2.msra.mxu0 0.0
    %412 = vmatprep.subr.mxu0 0.0
    %413 = vmatpush2.msra.mxu0 0.0
    %414 = vmatprep.subr.mxu0 0.0
    %415 = vmatpush2.msra.mxu0 0.0
    %416 = vmatprep.subr.mxu0 0.0
    %417 = vmatpush2.msra.mxu0 0.0
    %418 = vmatprep.subr.mxu0 0.0
    %419 = vmatpush2.msra.mxu0 0.0
    %420 = vmatprep.subr.mxu0 0.0
    %421 = vmatpush2.msra.mxu0 0.0
    %422 = vmatprep.subr.mxu0 0.0
    %423 = vmatpush2.msra.mxu0 0.0
    %424 = vmatprep.subr.mxu0 0.0
    %425 = vmatpush2.msra.mxu0 0.0
    %426 = vmatprep.subr.mxu0 0.0
    %427 = vmatpush2.msra.mxu0 0.0
    %428 = vmatprep.subr.mxu0 0.0
    %429 = vmatpush2.msra.mxu0 0.0
    %430 = vmatprep.subr.mxu0 0.0
    %431 = vmatpush2.msra.mxu0 0.0
    %432 = vmatprep.subr.mxu0 0.0
    %433 = vmatpush2.msra.mxu0 0.0
    %434 = vmatprep.subr.mxu0 0.0
    %435 = vmatpush2.msra.mxu0 0.0
    %436 = vmatprep.mubr.f32.mxu0 0.0
    %437 = vmatmul.mubr.f32.gmra.mxu0 %v370
    %v438 = vpop.f32.mrf.mxu0
    %v439 = vadd.f32 %v366, %v438
    %v440 = vpop.f32.mrf.mxu0
    %441 = vdwg.mxu0
    %v442 = vmax.f32 %v439, 0.0
    %v443 = vld [vmem:[%s9] sm:$0x1]
    %v444 = vld [vmem:[#allocation2] sm:$0x1]
    %446 = vset.pattern.permute.xlu0 0
    %447 = vperm.xlu0 %446, %v444
    %v448 = vpop.permute.xlu0 %447
    %v450 = vlaneseq
    %v451 = vshrl.u32 %v450, 7
    %v452 = vsub.s32 0, %v451
    %v453 = vrot.slane %v448, %v452
    %vm454 = vcmask 261120
    %v456 = vsel %vm454, %v443, 0
    %v459 = vsel %vm454, %v442, 0
    %461 = vmatprep.subr.mxu0 0.0
    %462 = vmatpush1.xpose.msra.mxu0 0.0
    %463 = vmatprep.subr.mxu0 0.0
    %464 = vmatpush1.xpose.msra.mxu0 0.0
    %465 = vmatprep.subr.mxu0 0.0
    %466 = vmatpush1.xpose.msra.mxu0 0.0
    %467 = vmatprep.subr.mxu0 0.0
    %468 = vmatpush1.xpose.msra.mxu0 0.0
    %469 = vmatprep.subr.mxu0 0.0
    %470 = vmatpush1.xpose.msra.mxu0 0.0
    %471 = vmatprep.subr.mxu0 0.0
    %472 = vmatpush1.xpose.msra.mxu0 0.0
    %473 = vmatprep.subr.mxu0 0.0
    %474 = vmatpush1.xpose.msra.mxu0 0.0
    %475 = vmatprep.subr.mxu0 0.0
    %476 = vmatpush1.xpose.msra.mxu0 0.0
    %477 = vmatprep.subr.mxu0 0.0
    %478 = vmatpush1.xpose.msra.mxu0 0.0
    %479 = vmatprep.subr.mxu0 0.0
    %480 = vmatpush1.xpose.msra.mxu0 0.0
    %481 = vmatprep.subr.mxu0 0.0
    %482 = vmatpush1.xpose.msra.mxu0 0.0
    %483 = vmatprep.subr.mxu0 0.0
    %484 = vmatpush1.xpose.msra.mxu0 0.0
    %485 = vmatprep.subr.mxu0 0.0
    %486 = vmatpush1.xpose.msra.mxu0 0.0
    %487 = vmatprep.subr.mxu0 0.0
    %488 = vmatpush1.xpose.msra.mxu0 0.0
    %489 = vmatprep.subr.mxu0 0.0
    %490 = vmatpush1.xpose.msra.mxu0 0.0
    %491 = vmatprep.subr.mxu0 0.0
    %492 = vmatpush1.xpose.msra.mxu0 %v459
    %493 = vmatprep.subr.mxu0 0.0
    %494 = vmatpush2.xpose.msra.mxu0 0.0
    %495 = vmatprep.subr.mxu0 0.0
    %496 = vmatpush2.xpose.msra.mxu0 0.0
    %497 = vmatprep.subr.mxu0 0.0
    %498 = vmatpush2.xpose.msra.mxu0 0.0
    %499 = vmatprep.subr.mxu0 0.0
    %500 = vmatpush2.xpose.msra.mxu0 0.0
    %501 = vmatprep.subr.mxu0 0.0
    %502 = vmatpush2.xpose.msra.mxu0 0.0
    %503 = vmatprep.subr.mxu0 0.0
    %504 = vmatpush2.xpose.msra.mxu0 0.0
    %505 = vmatprep.subr.mxu0 0.0
    %506 = vmatpush2.xpose.msra.mxu0 0.0
    %507 = vmatprep.subr.mxu0 0.0
    %508 = vmatpush2.xpose.msra.mxu0 0.0
    %509 = vmatprep.subr.mxu0 0.0
    %510 = vmatpush2.xpose.msra.mxu0 0.0
    %511 = vmatprep.subr.mxu0 0.0
    %512 = vmatpush2.xpose.msra.mxu0 0.0
    %513 = vmatprep.subr.mxu0 0.0
    %514 = vmatpush2.xpose.msra.mxu0 0.0
    %515 = vmatprep.subr.mxu0 0.0
    %516 = vmatpush2.xpose.msra.mxu0 0.0
    %517 = vmatprep.subr.mxu0 0.0
    %518 = vmatpush2.xpose.msra.mxu0 0.0
    %519 = vmatprep.subr.mxu0 0.0
    %520 = vmatpush2.xpose.msra.mxu0 0.0
    %521 = vmatprep.subr.mxu0 0.0
    %522 = vmatpush2.xpose.msra.mxu0 0.0
    %523 = vmatprep.subr.mxu0 0.0
    %524 = vmatpush2.xpose.msra.mxu0 0.0
    %525 = vmatprep.mubr.f32.mxu0 0.0
    %526 = vmatmul.mubr.f32.gmra.mxu0 %v456
    %v527 = vpop.f32.mrf.mxu0
    %v528 = vadd.f32 %v453, %v527
    %v529 = vpop.f32.mrf.mxu0
    %530 = vdwg.mxu0
    %vm531 = vcmask 57344
    %532 = vst.msk [vmem:[#allocation6] sm:$0x1] %vm531, %v528
    // Predicated region
    $region50: #{tpu_custom_call.1} parent=1 // pred_check
      _
    $region51: #{tpu_custom_call.1} parent=1 // pred_check_branch
      %534 = sbr.rel (0) target = $region53
    $region52: #{tpu_custom_call.1} parent=1 // pred_region
      %s536 = ssub.s32 16, 16
      %537 = vsyncadd [#allocation5], %s536
      %s539 = sshll.u32 [#allocation6], 4
      %s540 = int_to_ptr.vmem [resolvable:$true] %s539
      %542 = dma.vmem_to_hbm [thread:$0]  %s540, 16, %s11, [#allocation5]
    $region53: #{tpu_custom_call.1} parent=1 // pred_fallthru
      _
    // Predicated region
    $region54: #{tpu_custom_call.1} parent=1 // pred_check
      _
    $region55: #{tpu_custom_call.1} parent=1 // pred_check_branch
      %544 = sbr.rel (0) target = $region57
    $region56: #{tpu_custom_call.1} parent=1 // pred_region
      %545 = dma.done [#allocation5], 16
    $region57: #{tpu_custom_call.1} parent=1 // pred_fallthru
      _
    %546 = vsyncpa [#allocation4], 1
    %547 = vsyncpa [#allocation5], 1

</llo_original>
